<compile_context>
chip_gen: v6e
topology: v6e:2x2x1
jax: 0.10.0
libtpu: 0.0.40
codegen_flags: <defaults>
</compile_context>

<pallas_src>
import jax
import jax.numpy as jnp
from jax.experimental import pallas as pl
from jax.experimental.pallas import tpu as pltpu


def fc_kernel(x_ref, m1_ref, m2_ref,
              w1_ref, b1_ref, w2_ref, b2_ref, w3_ref, b3_ref,
              out_ref):
    # ---- layer 1: (TB, F) @ (F, 256), f32 accumulate, ReLU + dropout fused ----
    h1 = jnp.dot(x_ref[...], w1_ref[...],
                 preferred_element_type=jnp.float32) + b1_ref[...]
    h1 = jnp.maximum(h1, 0.0) * m1_ref[...]          # mask is {0.0, 2.0}
    h1 = h1.astype(jnp.bfloat16)                      # bf16 into next MXU pass

    # ---- layer 2: (TB, 256) @ (256, 64) ----
    h2 = jnp.dot(h1, w2_ref[...],
                 preferred_element_type=jnp.float32) + b2_ref[...]
    h2 = jnp.maximum(h2, 0.0) * m2_ref[...]
    h2 = h2.astype(jnp.bfloat16)

    # ---- layer 3: (TB, 64) @ (64, 128 padded) -> lane-dense store ----
    logits = jnp.dot(h2, w3_ref[...],
                     preferred_element_type=jnp.float32) + b3_ref[...]
    out_ref[...] = logits.astype(out_ref.dtype)


def fc_forward(x, params, seed=0, training=True):
    """x: (B, C, H, W) float32. Returns logits (B, 5) float32.

    Matches torch: F.dropout(relu(l1)), F.dropout(relu(l2)), l3(.).
    (F.dropout defaults to training=True, so dropout is applied unless
    training=False is passed here.)
    """
    B = x.shape[0]
    x2 = x.reshape(B, -1)
    in_f = x2.shape[1]
    w1, b1, w2, b2, w3, b3 = params

    # ---- batch tiling: weights stay resident, x / masks / out stream ----
    if B >= 128:
        TB = 128
        B_pad = pl.cdiv(B, TB) * TB
    else:
        TB = B                      # full-extent block (shape rule waived)
        B_pad = B
    if B_pad != B:
        x2 = jnp.pad(x2, ((0, B_pad - B), (0, 0)))

    # bf16 weights / activations (f32 accumulation inside the kernel).
    x_bf = x2.astype(jnp.bfloat16)
    w1_bf = w1.astype(jnp.bfloat16)
    w2_bf = w2.astype(jnp.bfloat16)
    b1r = b1.reshape(1, -1).astype(jnp.float32)
    b2r = b2.reshape(1, -1).astype(jnp.float32)

    # Lane-dense final layer: pad 5 -> 128 output columns with zeros.
    NP = 128
    w3_p = jnp.zeros((64, NP), jnp.bfloat16).at[:, :5].set(w3.astype(jnp.bfloat16))
    b3_p = jnp.zeros((1, NP), jnp.float32).at[:, :5].set(b3.reshape(1, -1))

    # Dropout masks (p=0.5, keep scaled by 1/(1-p)=2) generated with jax.random.
    # NOTE: cannot bit-match torch's RNG stream; semantics are identical.
    if training:
        k1, k2 = jax.random.split(jax.random.PRNGKey(seed))
        m1 = jnp.where(jax.random.bernoulli(k1, 0.5, (B_pad, 256)),
                       jnp.bfloat16(2.0), jnp.bfloat16(0.0))
        m2 = jnp.where(jax.random.bernoulli(k2, 0.5, (B_pad, 64)),
                       jnp.bfloat16(2.0), jnp.bfloat16(0.0))
    else:
        m1 = jnp.ones((B_pad, 256), jnp.bfloat16)
        m2 = jnp.ones((B_pad, 64), jnp.bfloat16)

    def batch_spec(cols):
        return pl.BlockSpec((TB, cols), lambda i: (i, 0))

    def resident_spec(shape):
        return pl.BlockSpec(shape, lambda i, _s=shape: (0,) * len(_s))

    # TODO(synk): for very large in_f (>~16K on v7x's 64 MiB VMEM) add a K grid
    # axis with a (TB, 256) f32 accumulator scratch instead of a full w1 block.
    out_full = pl.pallas_call(
        fc_kernel,
        out_shape=jax.ShapeDtypeStruct((B_pad, NP), jnp.float32),
        grid_spec=pltpu.PrefetchScalarGridSpec(
            num_scalar_prefetch=0,
            grid=(B_pad // TB,),
            in_specs=[
                batch_spec(in_f),             # x   (streamed per batch tile)
                batch_spec(256),              # dropout mask 1
                batch_spec(64),               # dropout mask 2
                resident_spec((in_f, 256)),   # w1 (bf16, VMEM resident)
                resident_spec((1, 256)),      # b1
                resident_spec((256, 64)),     # w2
                resident_spec((1, 64)),       # b2
                resident_spec((64, NP)),      # w3 (padded, lane dense)
                resident_spec((1, NP)),       # b3 (padded)
            ],
            out_specs=batch_spec(NP),
        ),
        compiler_params=pltpu.CompilerParams(
            dimension_semantics=("parallel",)),   # v7x: shard batch over 2 TCs
    )(x_bf, m1, m2, w1_bf, b1r, w2_bf, b2r, w3_p, b3_p)

    return out_full[:B, :5]


def init_fc_params(key, in_features):
    """Deterministic init mirroring torch.nn.Linear's U(-1/sqrt(fan_in), +1/sqrt(fan_in))."""
    def linear_init(k, fan_in, fan_out):
        kw, kb = jax.random.split(k)
        bound = 1.0 / jnp.sqrt(jnp.float32(fan_in))
        w = jax.random.uniform(kw, (fan_in, fan_out), jnp.float32, -bound, bound)
        b = jax.random.uniform(kb, (fan_out,), jnp.float32, -bound, bound)
        return w, b

    k1, k2, k3 = jax.random.split(key, 3)
    w1, b1 = linear_init(k1, in_features, 256)
    w2, b2 = linear_init(k2, 256, 64)
    w3, b3 = linear_init(k3, 64, 5)
    return (w1, b1, w2, b2, w3, b3)


if __name__ == "__main__":
    key = jax.random.PRNGKey(0)
    kx, kp = jax.random.split(key)

    # Small NCHW input: batch=2, channels=4, spatial=16x16 -> in_features = 1024
    B, C, H, W = 2, 4, 16, 16
    x = jax.random.normal(kx, (B, C, H, W), dtype=jnp.float32)

    params = init_fc_params(kp, C * H * W)

    logits = fc_forward(x, params, seed=0)
    jax.block_until_ready(logits)

    assert logits.shape == (B, 5)
    assert logits.dtype == jnp.float32
    print("KERNEL_OK")
</pallas_src>

<mosaic_0001>
module attributes {stable_mosaic.version = 11 : i64} {
  func.func @fc_kernel(%arg0: i32, %arg1: memref<2x1024xbf16, #tpu.memory_space<vmem>>, %arg2: memref<2x256xbf16, #tpu.memory_space<vmem>>, %arg3: memref<2x64xbf16, #tpu.memory_space<vmem>>, %arg4: memref<1024x256xbf16, #tpu.memory_space<vmem>>, %arg5: memref<1x256xf32, #tpu.memory_space<vmem>>, %arg6: memref<256x64xbf16, #tpu.memory_space<vmem>>, %arg7: memref<1x64xf32, #tpu.memory_space<vmem>>, %arg8: memref<64x128xbf16, #tpu.memory_space<vmem>>, %arg9: memref<1x128xf32, #tpu.memory_space<vmem>>, %arg10: memref<2x128xf32, #tpu.memory_space<vmem>>) attributes {dimension_semantics = [#tpu.dimension_semantics<parallel>], iteration_bounds = array<i64: 1>, scalar_prefetch = 0 : i64, scratch_operands = 0 : i64, tpu.core_type = #tpu.core_type<tc>, window_params = [{transform_indices = @transform_0, window_bounds = array<i64: 2, 1024>}, {transform_indices = @transform_1, window_bounds = array<i64: 2, 256>}, {transform_indices = @transform_2, window_bounds = array<i64: 2, 64>}, {pipeline_mode = #tpu.pipeline_mode<synchronous>, transform_indices = @transform_3, window_bounds = array<i64: 1024, 256>}, {pipeline_mode = #tpu.pipeline_mode<synchronous>, transform_indices = @transform_4, window_bounds = array<i64: 1, 256>}, {pipeline_mode = #tpu.pipeline_mode<synchronous>, transform_indices = @transform_5, window_bounds = array<i64: 256, 64>}, {pipeline_mode = #tpu.pipeline_mode<synchronous>, transform_indices = @transform_6, window_bounds = array<i64: 1, 64>}, {pipeline_mode = #tpu.pipeline_mode<synchronous>, transform_indices = @transform_7, window_bounds = array<i64: 64, 128>}, {pipeline_mode = #tpu.pipeline_mode<synchronous>, transform_indices = @transform_8, window_bounds = array<i64: 1, 128>}, {transform_indices = @transform_9, window_bounds = array<i64: 2, 128>}]} {
    %c0 = arith.constant 0 : index
    %c0_0 = arith.constant 0 : index
    %0 = vector.load %arg1[%c0, %c0_0] : memref<2x1024xbf16, #tpu.memory_space<vmem>>, vector<2x1024xbf16>
    %c0_1 = arith.constant 0 : index
    %c0_2 = arith.constant 0 : index
    %1 = vector.load %arg4[%c0_1, %c0_2] : memref<1024x256xbf16, #tpu.memory_space<vmem>>, vector<1024x256xbf16>
    %cst = arith.constant dense<0.000000e+00> : vector<2x256xf32>
    %2 = tpu.matmul %0, %1, %cst {dimension_numbers = #tpu.dot_dimension_numbers<[1], [0], [0], [1], [0, 0, 1, 1], [], []>} : vector<2x1024xbf16>, vector<1024x256xbf16>, vector<2x256xf32> -> vector<2x256xf32>
    %c0_3 = arith.constant 0 : index
    %c0_4 = arith.constant 0 : index
    %3 = vector.load %arg5[%c0_3, %c0_4] : memref<1x256xf32, #tpu.memory_space<vmem>>, vector<1x256xf32>
    %4 = vector.broadcast %3 : vector<1x256xf32> to vector<2x256xf32>
    %5 = arith.addf %2, %4 : vector<2x256xf32>
    %cst_5 = arith.constant 0.000000e+00 : f32
    %6 = vector.broadcast %cst_5 : f32 to vector<2x256xf32>
    %7 = arith.maximumf %5, %6 : vector<2x256xf32>
    %c0_6 = arith.constant 0 : index
    %c0_7 = arith.constant 0 : index
    %8 = vector.load %arg2[%c0_6, %c0_7] : memref<2x256xbf16, #tpu.memory_space<vmem>>, vector<2x256xbf16>
    %9 = arith.extf %8 : vector<2x256xbf16> to vector<2x256xf32>
    %10 = arith.mulf %7, %9 : vector<2x256xf32>
    %11 = arith.truncf %10 : vector<2x256xf32> to vector<2x256xbf16>
    %c0_8 = arith.constant 0 : index
    %c0_9 = arith.constant 0 : index
    %12 = vector.load %arg6[%c0_8, %c0_9] : memref<256x64xbf16, #tpu.memory_space<vmem>>, vector<256x64xbf16>
    %cst_10 = arith.constant dense<0.000000e+00> : vector<2x64xf32>
    %13 = tpu.matmul %11, %12, %cst_10 {dimension_numbers = #tpu.dot_dimension_numbers<[1], [0], [0], [1], [0, 0, 1, 1], [], []>} : vector<2x256xbf16>, vector<256x64xbf16>, vector<2x64xf32> -> vector<2x64xf32>
    %c0_11 = arith.constant 0 : index
    %c0_12 = arith.constant 0 : index
    %14 = vector.load %arg7[%c0_11, %c0_12] : memref<1x64xf32, #tpu.memory_space<vmem>>, vector<1x64xf32>
    %15 = vector.broadcast %14 : vector<1x64xf32> to vector<2x64xf32>
    %16 = arith.addf %13, %15 : vector<2x64xf32>
    %cst_13 = arith.constant 0.000000e+00 : f32
    %17 = vector.broadcast %cst_13 : f32 to vector<2x64xf32>
    %18 = arith.maximumf %16, %17 : vector<2x64xf32>
    %c0_14 = arith.constant 0 : index
    %c0_15 = arith.constant 0 : index
    %19 = vector.load %arg3[%c0_14, %c0_15] : memref<2x64xbf16, #tpu.memory_space<vmem>>, vector<2x64xbf16>
    %20 = arith.extf %19 : vector<2x64xbf16> to vector<2x64xf32>
    %21 = arith.mulf %18, %20 : vector<2x64xf32>
    %22 = arith.truncf %21 : vector<2x64xf32> to vector<2x64xbf16>
    %c0_16 = arith.constant 0 : index
    %c0_17 = arith.constant 0 : index
    %23 = vector.load %arg8[%c0_16, %c0_17] : memref<64x128xbf16, #tpu.memory_space<vmem>>, vector<64x128xbf16>
    %cst_18 = arith.constant dense<0.000000e+00> : vector<2x128xf32>
    %24 = tpu.matmul %22, %23, %cst_18 {dimension_numbers = #tpu.dot_dimension_numbers<[1], [0], [0], [1], [0, 0, 1, 1], [], []>} : vector<2x64xbf16>, vector<64x128xbf16>, vector<2x128xf32> -> vector<2x128xf32>
    %c0_19 = arith.constant 0 : index
    %c0_20 = arith.constant 0 : index
    %25 = vector.load %arg9[%c0_19, %c0_20] : memref<1x128xf32, #tpu.memory_space<vmem>>, vector<1x128xf32>
    %26 = vector.broadcast %25 : vector<1x128xf32> to vector<2x128xf32>
    %27 = arith.addf %24, %26 : vector<2x128xf32>
    %c0_21 = arith.constant 0 : index
    %c0_22 = arith.constant 0 : index
    %28 = vector.load %arg10[%c0_21, %c0_22] : memref<2x128xf32, #tpu.memory_space<vmem>>, vector<2x128xf32>
    tpu.vector_store %arg10[%c0_21, %c0_22], %27 {strides = array<i32>} : memref<2x128xf32, #tpu.memory_space<vmem>>, vector<2x128xf32>,
    return
  }
  func.func @transform_0(%arg0: i32) -> (i32, i32) {
    %c0_i32 = arith.constant 0 : i32
    %c0_i32_0 = arith.constant 0 : i32
    return %arg0, %c0_i32 : i32, i32
  }
  func.func @transform_1(%arg0: i32) -> (i32, i32) {
    %c0_i32 = arith.constant 0 : i32
    %c0_i32_0 = arith.constant 0 : i32
    return %arg0, %c0_i32 : i32, i32
  }
  func.func @transform_2(%arg0: i32) -> (i32, i32) {
    %c0_i32 = arith.constant 0 : i32
    %c0_i32_0 = arith.constant 0 : i32
    return %arg0, %c0_i32 : i32, i32
  }
  func.func @transform_3(%arg0: i32) -> (i32, i32) {
    %c0_i32 = arith.constant 0 : i32
    %c0_i32_0 = arith.constant 0 : i32
    %c0_i32_1 = arith.constant 0 : i32
    return %c0_i32, %c0_i32_0 : i32, i32
  }
  func.func @transform_4(%arg0: i32) -> (i32, i32) {
    %c0_i32 = arith.constant 0 : i32
    %c0_i32_0 = arith.constant 0 : i32
    %c0_i32_1 = arith.constant 0 : i32
    return %c0_i32, %c0_i32_0 : i32, i32
  }
  func.func @transform_5(%arg0: i32) -> (i32, i32) {
    %c0_i32 = arith.constant 0 : i32
    %c0_i32_0 = arith.constant 0 : i32
    %c0_i32_1 = arith.constant 0 : i32
    return %c0_i32, %c0_i32_0 : i32, i32
  }
  func.func @transform_6(%arg0: i32) -> (i32, i32) {
    %c0_i32 = arith.constant 0 : i32
    %c0_i32_0 = arith.constant 0 : i32
    %c0_i32_1 = arith.constant 0 : i32
    return %c0_i32, %c0_i32_0 : i32, i32
  }
  func.func @transform_7(%arg0: i32) -> (i32, i32) {
    %c0_i32 = arith.constant 0 : i32
    %c0_i32_0 = arith.constant 0 : i32
    %c0_i32_1 = arith.constant 0 : i32
    return %c0_i32, %c0_i32_0 : i32, i32
  }
  func.func @transform_8(%arg0: i32) -> (i32, i32) {
    %c0_i32 = arith.constant 0 : i32
    %c0_i32_0 = arith.constant 0 : i32
    %c0_i32_1 = arith.constant 0 : i32
    return %c0_i32, %c0_i32_0 : i32, i32
  }
  func.func @transform_9(%arg0: i32) -> (i32, i32) {
    %c0_i32 = arith.constant 0 : i32
    %c0_i32_0 = arith.constant 0 : i32
    return %arg0, %c0_i32 : i32, i32
  }
}

</mosaic_0001>

<llo_original>
// kernel: tpu_custom_call.1
$region0: #{tpu_custom_call.1}
  #allocation0 [shape = 'u32[]', space=smem, size = 0x4, offset = 0x4, fixed_abs, tag = 'smem constant byte address 0x4 - core index']
  #allocation1 [shape = 'u32[144,128]{1,0:T(1,128)}', space=vmem, size = 0x12000, scoped, tag = 'internal scratch']
  %s0 = inlined_call_operand.vmem [shape: bf16[2,1024], index: 0, kind: input, shape index: {}]
  %s1 = inlined_call_operand.vmem [shape: bf16[2,256], index: 1, kind: input, shape index: {}]
  %s2 = inlined_call_operand.vmem [shape: bf16[2,64], index: 2, kind: input, shape index: {}]
  %s3 = inlined_call_operand.hbm [shape: bf16[1024,256], index: 3, kind: input, shape index: {}]
  %s4 = inlined_call_operand.vmem [shape: f32[1,256], index: 4, kind: input, shape index: {}]
  %s5 = inlined_call_operand.vmem [shape: bf16[256,64], index: 5, kind: input, shape index: {}]
  %s6 = inlined_call_operand.vmem [shape: f32[1,64], index: 6, kind: input, shape index: {}]
  %s7 = inlined_call_operand.vmem [shape: bf16[64,128], index: 7, kind: input, shape index: {}]
  %s8 = inlined_call_operand.vmem [shape: f32[1,128], index: 8, kind: input, shape index: {}]
  %s9 = inlined_call_operand.hbm [shape: f32[2,128], index: 9, kind: output, shape index: {}]
  %s10 = sld [smem:[#allocation0]]
  $region50: #{tpu_custom_call.1} parent=0
    _
  %s12 = ssub.s32 1, %s10
  %s13 = scalar_select 0, %s12, %s10
  $region1: #{tpu_custom_call.1} parent=0
    #allocation2 [shape = 'u8[524288]{0}', space=vmem, size = 0x80000, scoped, tag = 'input window, operand 3, single buffered']
    #allocation3 [shape = 's32[1]{0}', space=sflag, size = 0x4, scoped, tag = 'scoped memory for tpu_custom_call.1']
    #allocation4 [shape = 's32[1]{0}', space=sflag, size = 0x4, scoped, tag = 'scoped memory for tpu_custom_call.1']
    #allocation5 [shape = 'u8[1024]{0}', space=vmem, size = 0x400, scoped, tag = 'output window, operand 0, single buffered']
    %14 = vsyncpa [#allocation3], 0
    %15 = vsyncpa [#allocation4], 0
    // Predicated region
    $region2: #{tpu_custom_call.1} parent=1 // pred_check
      _
    $region3: #{tpu_custom_call.1} parent=1 // pred_check_branch
      %17 = sbr.rel (0) target = $region5
    $region4: #{tpu_custom_call.1} parent=1 // pred_region
      _
    $region5: #{tpu_custom_call.1} parent=1 // pred_fallthru
      _
    // Predicated region
    $region6: #{tpu_custom_call.1} parent=1 // pred_check
      _
    $region7: #{tpu_custom_call.1} parent=1 // pred_check_branch
      %19 = sbr.rel (0) target = $region9
    $region8: #{tpu_custom_call.1} parent=1 // pred_region
      _
    $region9: #{tpu_custom_call.1} parent=1 // pred_fallthru
      _
    // Predicated region
    $region10: #{tpu_custom_call.1} parent=1 // pred_check
      _
    $region11: #{tpu_custom_call.1} parent=1 // pred_check_branch
      %21 = sbr.rel (0) target = $region13
    $region12: #{tpu_custom_call.1} parent=1 // pred_region
      _
    $region13: #{tpu_custom_call.1} parent=1 // pred_fallthru
      _
    // Predicated region
    $region14: #{tpu_custom_call.1} parent=1 // pred_check
      _
    $region15: #{tpu_custom_call.1} parent=1 // pred_check_branch
      %23 = sbr.rel (0) target = $region17
    $region16: #{tpu_custom_call.1} parent=1 // pred_region
      %s25 = ssub.s32 16384, 16384
      %26 = vsyncadd [#allocation3], %s25
      %s27 = sshll.u32 [#allocation2], 4
      %s28 = int_to_ptr.vmem [resolvable:$true] %s27
      %33 = dma.hbm_to_vmem [thread:$0]  %s3, 16384, %s28, [#allocation3], 128, 128, 8
    $region17: #{tpu_custom_call.1} parent=1 // pred_fallthru
      _
    // Predicated region
    $region18: #{tpu_custom_call.1} parent=1 // pred_check
      _
    $region19: #{tpu_custom_call.1} parent=1 // pred_check_branch
      %35 = sbr.rel (0) target = $region21
    $region20: #{tpu_custom_call.1} parent=1 // pred_region
      _
    $region21: #{tpu_custom_call.1} parent=1 // pred_fallthru
      _
    // Predicated region
    $region22: #{tpu_custom_call.1} parent=1 // pred_check
      _
    $region23: #{tpu_custom_call.1} parent=1 // pred_check_branch
      %37 = sbr.rel (0) target = $region25
    $region24: #{tpu_custom_call.1} parent=1 // pred_region
      _
    $region25: #{tpu_custom_call.1} parent=1 // pred_fallthru
      _
    // Predicated region
    $region26: #{tpu_custom_call.1} parent=1 // pred_check
      _
    $region27: #{tpu_custom_call.1} parent=1 // pred_check_branch
      %39 = sbr.rel (0) target = $region29
    $region28: #{tpu_custom_call.1} parent=1 // pred_region
      _
    $region29: #{tpu_custom_call.1} parent=1 // pred_fallthru
      _
    // Predicated region
    $region30: #{tpu_custom_call.1} parent=1 // pred_check
      _
    $region31: #{tpu_custom_call.1} parent=1 // pred_check_branch
      %41 = sbr.rel (0) target = $region33
    $region32: #{tpu_custom_call.1} parent=1 // pred_region
      _
    $region33: #{tpu_custom_call.1} parent=1 // pred_fallthru
      _
    // Predicated region
    $region34: #{tpu_custom_call.1} parent=1 // pred_check
      _
    $region35: #{tpu_custom_call.1} parent=1 // pred_check_branch
      %43 = sbr.rel (0) target = $region37
    $region36: #{tpu_custom_call.1} parent=1 // pred_region
      _
    $region37: #{tpu_custom_call.1} parent=1 // pred_fallthru
      _
    // Predicated region
    $region38: #{tpu_custom_call.1} parent=1 // pred_check
      _
    $region39: #{tpu_custom_call.1} parent=1 // pred_check_branch
      %45 = sbr.rel (0) target = $region41
    $region40: #{tpu_custom_call.1} parent=1 // pred_region
      %46 = dma.done [#allocation3], 16384
    $region41: #{tpu_custom_call.1} parent=1 // pred_fallthru
      _
    %v48 = vld [vmem:[%s0] sm:$0xff]
    %v49 = vld [vmem:[#allocation2] sm:$0xff]
    %v50 = vld [vmem:[#allocation2 + $0x8] sm:$0xff]
    %v51 = vld [vmem:[#allocation2 + $0x10] sm:$0xff]
    %v52 = vld [vmem:[#allocation2 + $0x18] sm:$0xff]
    %v53 = vld [vmem:[#allocation2 + $0x20] sm:$0xff]
    %v54 = vld [vmem:[#allocation2 + $0x28] sm:$0xff]
    %v55 = vld [vmem:[#allocation2 + $0x30] sm:$0xff]
    %v56 = vld [vmem:[#allocation2 + $0x38] sm:$0xff]
    %v57 = vld [vmem:[#allocation2 + $0x40] sm:$0xff]
    %v58 = vld [vmem:[#allocation2 + $0x48] sm:$0xff]
    %v59 = vld [vmem:[#allocation2 + $0x50] sm:$0xff]
    %v60 = vld [vmem:[#allocation2 + $0x58] sm:$0xff]
    %v61 = vld [vmem:[#allocation2 + $0x60] sm:$0xff]
    %v62 = vld [vmem:[#allocation2 + $0x68] sm:$0xff]
    %v63 = vld [vmem:[#allocation2 + $0x70] sm:$0xff]
    %v64 = vld [vmem:[#allocation2 + $0x78] sm:$0xff]
    %v65 = vld [vmem:[#allocation2 + $0x80] sm:$0xff]
    %v66 = vld [vmem:[#allocation2 + $0x88] sm:$0xff]
    %v67 = vld [vmem:[#allocation2 + $0x90] sm:$0xff]
    %v68 = vld [vmem:[#allocation2 + $0x98] sm:$0xff]
    %v69 = vld [vmem:[#allocation2 + $0xa0] sm:$0xff]
    %v70 = vld [vmem:[#allocation2 + $0xa8] sm:$0xff]
    %v71 = vld [vmem:[#allocation2 + $0xb0] sm:$0xff]
    %v72 = vld [vmem:[#allocation2 + $0xb8] sm:$0xff]
    %v73 = vld [vmem:[#allocation2 + $0xc0] sm:$0xff]
    %v74 = vld [vmem:[#allocation2 + $0xc8] sm:$0xff]
    %v75 = vld [vmem:[#allocation2 + $0xd0] sm:$0xff]
    %v76 = vld [vmem:[#allocation2 + $0xd8] sm:$0xff]
    %v77 = vld [vmem:[#allocation2 + $0xe0] sm:$0xff]
    %v78 = vld [vmem:[#allocation2 + $0xe8] sm:$0xff]
    %v79 = vld [vmem:[#allocation2 + $0xf0] sm:$0xff]
    %v80 = vld [vmem:[#allocation2 + $0xf8] sm:$0xff]
    %v81 = vld [vmem:[#allocation2 + $0x100] sm:$0xff]
    %v82 = vld [vmem:[#allocation2 + $0x108] sm:$0xff]
    %v83 = vld [vmem:[#allocation2 + $0x110] sm:$0xff]
    %v84 = vld [vmem:[#allocation2 + $0x118] sm:$0xff]
    %v85 = vld [vmem:[#allocation2 + $0x120] sm:$0xff]
    %v86 = vld [vmem:[#allocation2 + $0x128] sm:$0xff]
    %v87 = vld [vmem:[#allocation2 + $0x130] sm:$0xff]
    %v88 = vld [vmem:[#allocation2 + $0x138] sm:$0xff]
    %v89 = vld [vmem:[#allocation2 + $0x140] sm:$0xff]
    %v90 = vld [vmem:[#allocation2 + $0x148] sm:$0xff]
    %v91 = vld [vmem:[#allocation2 + $0x150] sm:$0xff]
    %v92 = vld [vmem:[#allocation2 + $0x158] sm:$0xff]
    %v93 = vld [vmem:[#allocation2 + $0x160] sm:$0xff]
    %v94 = vld [vmem:[#allocation2 + $0x168] sm:$0xff]
    %v95 = vld [vmem:[#allocation2 + $0x170] sm:$0xff]
    %v96 = vld [vmem:[#allocation2 + $0x178] sm:$0xff]
    %v97 = vld [vmem:[#allocation2 + $0x180] sm:$0xff]
    %v98 = vld [vmem:[#allocation2 + $0x188] sm:$0xff]
    %v99 = vld [vmem:[#allocation2 + $0x190] sm:$0xff]
    %v100 = vld [vmem:[#allocation2 + $0x198] sm:$0xff]
    %v101 = vld [vmem:[#allocation2 + $0x1a0] sm:$0xff]
    %v102 = vld [vmem:[#allocation2 + $0x1a8] sm:$0xff]
    %v103 = vld [vmem:[#allocation2 + $0x1b0] sm:$0xff]
    %v104 = vld [vmem:[#allocation2 + $0x1b8] sm:$0xff]
    %v105 = vld [vmem:[#allocation2 + $0x1c0] sm:$0xff]
    %v106 = vld [vmem:[#allocation2 + $0x1c8] sm:$0xff]
    %v107 = vld [vmem:[#allocation2 + $0x1d0] sm:$0xff]
    %v108 = vld [vmem:[#allocation2 + $0x1d8] sm:$0xff]
    %v109 = vld [vmem:[#allocation2 + $0x1e0] sm:$0xff]
    %v110 = vld [vmem:[#allocation2 + $0x1e8] sm:$0xff]
    %v111 = vld [vmem:[#allocation2 + $0x1f0] sm:$0xff]
    %v112 = vld [vmem:[#allocation2 + $0x1f8] sm:$0xff]
    %v113 = vld [vmem:[#allocation2 + $0x200] sm:$0xff]
    %v114 = vld [vmem:[#allocation2 + $0x208] sm:$0xff]
    %v115 = vld [vmem:[#allocation2 + $0x210] sm:$0xff]
    %v116 = vld [vmem:[#allocation2 + $0x218] sm:$0xff]
    %v117 = vld [vmem:[#allocation2 + $0x220] sm:$0xff]
    %v118 = vld [vmem:[#allocation2 + $0x228] sm:$0xff]
    %v119 = vld [vmem:[#allocation2 + $0x230] sm:$0xff]
    %v120 = vld [vmem:[#allocation2 + $0x238] sm:$0xff]
    %v121 = vld [vmem:[#allocation2 + $0x240] sm:$0xff]
    %v122 = vld [vmem:[#allocation2 + $0x248] sm:$0xff]
    %v123 = vld [vmem:[#allocation2 + $0x250] sm:$0xff]
    %v124 = vld [vmem:[#allocation2 + $0x258] sm:$0xff]
    %v125 = vld [vmem:[#allocation2 + $0x260] sm:$0xff]
    %v126 = vld [vmem:[#allocation2 + $0x268] sm:$0xff]
    %v127 = vld [vmem:[#allocation2 + $0x270] sm:$0xff]
    %v128 = vld [vmem:[#allocation2 + $0x278] sm:$0xff]
    %v129 = vld [vmem:[#allocation2 + $0x280] sm:$0xff]
    %v130 = vld [vmem:[#allocation2 + $0x288] sm:$0xff]
    %v131 = vld [vmem:[#allocation2 + $0x290] sm:$0xff]
    %v132 = vld [vmem:[#allocation2 + $0x298] sm:$0xff]
    %v133 = vld [vmem:[#allocation2 + $0x2a0] sm:$0xff]
    %v134 = vld [vmem:[#allocation2 + $0x2a8] sm:$0xff]
    %v135 = vld [vmem:[#allocation2 + $0x2b0] sm:$0xff]
    %v136 = vld [vmem:[#allocation2 + $0x2b8] sm:$0xff]
    %v137 = vld [vmem:[#allocation2 + $0x2c0] sm:$0xff]
    %v138 = vld [vmem:[#allocation2 + $0x2c8] sm:$0xff]
    %v139 = vld [vmem:[#allocation2 + $0x2d0] sm:$0xff]
    %v140 = vld [vmem:[#allocation2 + $0x2d8] sm:$0xff]
    %v141 = vld [vmem:[#allocation2 + $0x2e0] sm:$0xff]
    %v142 = vld [vmem:[#allocation2 + $0x2e8] sm:$0xff]
    %v143 = vld [vmem:[#allocation2 + $0x2f0] sm:$0xff]
    %v144 = vld [vmem:[#allocation2 + $0x2f8] sm:$0xff]
    %v145 = vld [vmem:[#allocation2 + $0x300] sm:$0xff]
    %v146 = vld [vmem:[#allocation2 + $0x308] sm:$0xff]
    %v147 = vld [vmem:[#allocation2 + $0x310] sm:$0xff]
    %v148 = vld [vmem:[#allocation2 + $0x318] sm:$0xff]
    %v149 = vld [vmem:[#allocation2 + $0x320] sm:$0xff]
    %v150 = vld [vmem:[#allocation2 + $0x328] sm:$0xff]
    %v151 = vld [vmem:[#allocation2 + $0x330] sm:$0xff]
    %v152 = vld [vmem:[#allocation2 + $0x338] sm:$0xff]
    %v153 = vld [vmem:[#allocation2 + $0x340] sm:$0xff]
    %v154 = vld [vmem:[#allocation2 + $0x348] sm:$0xff]
    %v155 = vld [vmem:[#allocation2 + $0x350] sm:$0xff]
    %v156 = vld [vmem:[#allocation2 + $0x358] sm:$0xff]
    %v157 = vld [vmem:[#allocation2 + $0x360] sm:$0xff]
    %v158 = vld [vmem:[#allocation2 + $0x368] sm:$0xff]
    %v159 = vld [vmem:[#allocation2 + $0x370] sm:$0xff]
    %v160 = vld [vmem:[#allocation2 + $0x378] sm:$0xff]
    %v161 = vld [vmem:[#allocation2 + $0x380] sm:$0xff]
    %v162 = vld [vmem:[#allocation2 + $0x388] sm:$0xff]
    %v163 = vld [vmem:[#allocation2 + $0x390] sm:$0xff]
    %v164 = vld [vmem:[#allocation2 + $0x398] sm:$0xff]
    %v165 = vld [vmem:[#allocation2 + $0x3a0] sm:$0xff]
    %v166 = vld [vmem:[#allocation2 + $0x3a8] sm:$0xff]
    %v167 = vld [vmem:[#allocation2 + $0x3b0] sm:$0xff]
    %v168 = vld [vmem:[#allocation2 + $0x3b8] sm:$0xff]
    %v169 = vld [vmem:[#allocation2 + $0x3c0] sm:$0xff]
    %v170 = vld [vmem:[#allocation2 + $0x3c8] sm:$0xff]
    %v171 = vld [vmem:[#allocation2 + $0x3d0] sm:$0xff]
    %v172 = vld [vmem:[#allocation2 + $0x3d8] sm:$0xff]
    %v173 = vld [vmem:[#allocation2 + $0x3e0] sm:$0xff]
    %v174 = vld [vmem:[#allocation2 + $0x3e8] sm:$0xff]
    %v175 = vld [vmem:[#allocation2 + $0x3f0] sm:$0xff]
    %v176 = vld [vmem:[#allocation2 + $0x3f8] sm:$0xff]
    %v177 = vld [vmem:[%s4] sm:$0x3]
    %v179 = vlaneseq
    %v180 = vshrl.u32 %v179, 7
    %v181 = vsub.s32 0, %v180
    %v182 = vrot.slane %v177, %v181
    %v183 = vlaneseq
    %v184 = vshrl.u32 %v183, 7
    %v185 = vsub.s32 1, %v184
    %v186 = vrot.slane %v177, %v185
    %v190 = vcombine.high %v48, %v48
    %v192 = vunpack.c.l.s4 1966171168
    %v193 = vunpack.c.0.s8 %v192
    %v194 = vlaneseq
    %v195 = vshrl.u32 %v194, 7
    %v196 = vsub.s32 %v193, %v195
    %v197 = vrot.slane %v48, %v196
    %v199 = vunpack.c.l.s4 1966171168
    %v200 = vunpack.c.0.s8 %v199
    %v201 = vlaneseq
    %v202 = vshrl.u32 %v201, 7
    %v203 = vsub.s32 %v200, %v202
    %v204 = vrot.slane %v190, %v203
    %v205 = vcombine.high %v197, %v197
    %v206 = vcombine.high %v204, %v204
    %v208 = vunpack.c.l.s4 1966171168
    %v209 = vunpack.c.0.s8 %v208
    %v210 = vlaneseq
    %v211 = vshrl.u32 %v210, 7
    %v212 = vsub.s32 %v209, %v211
    %v213 = vrot.slane %v197, %v212
    %v215 = vunpack.c.l.s4 1966171168
    %v216 = vunpack.c.0.s8 %v215
    %v217 = vlaneseq
    %v218 = vshrl.u32 %v217, 7
    %v219 = vsub.s32 %v216, %v218
    %v220 = vrot.slane %v204, %v219
    %v222 = vunpack.c.l.s4 1966171168
    %v223 = vunpack.c.0.s8 %v222
    %v224 = vlaneseq
    %v225 = vshrl.u32 %v224, 7
    %v226 = vsub.s32 %v223, %v225
    %v227 = vrot.slane %v205, %v226
    %v229 = vunpack.c.l.s4 1966171168
    %v230 = vunpack.c.0.s8 %v229
    %v231 = vlaneseq
    %v232 = vshrl.u32 %v231, 7
    %v233 = vsub.s32 %v230, %v232
    %v234 = vrot.slane %v206, %v233
    %v235 = vcombine.high %v213, %v213
    %v236 = vcombine.high %v220, %v220
    %v237 = vcombine.high %v227, %v227
    %v238 = vcombine.high %v234, %v234
    %v375 = vunpack.c.l.b16 %v49
    %v376 = vunpack.c.h.b16 %v49
    %v377 = vunpack.c.l.b16 %v50
    %v378 = vunpack.c.h.b16 %v50
    %v379 = vunpack.c.l.b16 %v51
    %v380 = vunpack.c.h.b16 %v51
    %v381 = vunpack.c.l.b16 %v52
    %v382 = vunpack.c.h.b16 %v52
    %v383 = vunpack.c.l.b16 %v53
    %v384 = vunpack.c.h.b16 %v53
    %v385 = vunpack.c.l.b16 %v54
    %v386 = vunpack.c.h.b16 %v54
    %v387 = vunpack.c.l.b16 %v55
    %v388 = vunpack.c.h.b16 %v55
    %v389 = vunpack.c.l.b16 %v56
    %v390 = vunpack.c.h.b16 %v56
    %v391 = vunpack.c.l.b16 %v57
    %v392 = vunpack.c.h.b16 %v57
    %v393 = vunpack.c.l.b16 %v58
    %v394 = vunpack.c.h.b16 %v58
    %v395 = vunpack.c.l.b16 %v59
    %v396 = vunpack.c.h.b16 %v59
    %v397 = vunpack.c.l.b16 %v60
    %v398 = vunpack.c.h.b16 %v60
    %v399 = vunpack.c.l.b16 %v61
    %v400 = vunpack.c.h.b16 %v61
    %v401 = vunpack.c.l.b16 %v62
    %v402 = vunpack.c.h.b16 %v62
    %v403 = vunpack.c.l.b16 %v63
    %v404 = vunpack.c.h.b16 %v63
    %v405 = vunpack.c.l.b16 %v64
    %v406 = vunpack.c.h.b16 %v64
    %v407 = vunpack.c.l.b16 %v65
    %v408 = vunpack.c.h.b16 %v65
    %v409 = vunpack.c.l.b16 %v66
    %v410 = vunpack.c.h.b16 %v66
    %v411 = vunpack.c.l.b16 %v67
    %v412 = vunpack.c.h.b16 %v67
    %v413 = vunpack.c.l.b16 %v68
    %v414 = vunpack.c.h.b16 %v68
    %v415 = vunpack.c.l.b16 %v69
    %v416 = vunpack.c.h.b16 %v69
    %v417 = vunpack.c.l.b16 %v70
    %v418 = vunpack.c.h.b16 %v70
    %v419 = vunpack.c.l.b16 %v71
    %v420 = vunpack.c.h.b16 %v71
    %v421 = vunpack.c.l.b16 %v72
    %v422 = vunpack.c.h.b16 %v72
    %v423 = vunpack.c.l.b16 %v73
    %v424 = vunpack.c.h.b16 %v73
    %v425 = vunpack.c.l.b16 %v74
    %v426 = vunpack.c.h.b16 %v74
    %v427 = vunpack.c.l.b16 %v75
    %v428 = vunpack.c.h.b16 %v75
    %v429 = vunpack.c.l.b16 %v76
    %v430 = vunpack.c.h.b16 %v76
    %v431 = vunpack.c.l.b16 %v77
    %v432 = vunpack.c.h.b16 %v77
    %v433 = vunpack.c.l.b16 %v78
    %v434 = vunpack.c.h.b16 %v78
    %v435 = vunpack.c.l.b16 %v79
    %v436 = vunpack.c.h.b16 %v79
    %v437 = vunpack.c.l.b16 %v80
    %v438 = vunpack.c.h.b16 %v80
    %v439 = vunpack.c.l.b16 %v81
    %v440 = vunpack.c.h.b16 %v81
    %v441 = vunpack.c.l.b16 %v82
    %v442 = vunpack.c.h.b16 %v82
    %v443 = vunpack.c.l.b16 %v83
    %v444 = vunpack.c.h.b16 %v83
    %v445 = vunpack.c.l.b16 %v84
    %v446 = vunpack.c.h.b16 %v84
    %v447 = vunpack.c.l.b16 %v85
    %v448 = vunpack.c.h.b16 %v85
    %v449 = vunpack.c.l.b16 %v86
    %v450 = vunpack.c.h.b16 %v86
    %v451 = vunpack.c.l.b16 %v87
    %v452 = vunpack.c.h.b16 %v87
    %v453 = vunpack.c.l.b16 %v88
    %v454 = vunpack.c.h.b16 %v88
    %v455 = vunpack.c.l.b16 %v89
    %v456 = vunpack.c.h.b16 %v89
    %v457 = vunpack.c.l.b16 %v90
    %v458 = vunpack.c.h.b16 %v90
    %v459 = vunpack.c.l.b16 %v91
    %v460 = vunpack.c.h.b16 %v91
    %v461 = vunpack.c.l.b16 %v92
    %v462 = vunpack.c.h.b16 %v92
    %v463 = vunpack.c.l.b16 %v93
    %v464 = vunpack.c.h.b16 %v93
    %v465 = vunpack.c.l.b16 %v94
    %v466 = vunpack.c.h.b16 %v94
    %v467 = vunpack.c.l.b16 %v95
    %v468 = vunpack.c.h.b16 %v95
    %v469 = vunpack.c.l.b16 %v96
    %v470 = vunpack.c.h.b16 %v96
    %v471 = vunpack.c.l.b16 %v97
    %v472 = vunpack.c.h.b16 %v97
    %v473 = vunpack.c.l.b16 %v98
    %v474 = vunpack.c.h.b16 %v98
    %v475 = vunpack.c.l.b16 %v99
    %v476 = vunpack.c.h.b16 %v99
    %v477 = vunpack.c.l.b16 %v100
    %v478 = vunpack.c.h.b16 %v100
    %v479 = vunpack.c.l.b16 %v101
    %v480 = vunpack.c.h.b16 %v101
    %v481 = vunpack.c.l.b16 %v102
    %v482 = vunpack.c.h.b16 %v102
    %v483 = vunpack.c.l.b16 %v103
    %v484 = vunpack.c.h.b16 %v103
    %v485 = vunpack.c.l.b16 %v104
    %v486 = vunpack.c.h.b16 %v104
    %v487 = vunpack.c.l.b16 %v105
    %v488 = vunpack.c.h.b16 %v105
    %v489 = vunpack.c.l.b16 %v106
    %v490 = vunpack.c.h.b16 %v106
    %v491 = vunpack.c.l.b16 %v107
    %v492 = vunpack.c.h.b16 %v107
    %v493 = vunpack.c.l.b16 %v108
    %v494 = vunpack.c.h.b16 %v108
    %v495 = vunpack.c.l.b16 %v109
    %v496 = vunpack.c.h.b16 %v109
    %v497 = vunpack.c.l.b16 %v110
    %v498 = vunpack.c.h.b16 %v110
    %v499 = vunpack.c.l.b16 %v111
    %v500 = vunpack.c.h.b16 %v111
    %v501 = vunpack.c.l.b16 %v112
    %v502 = vunpack.c.h.b16 %v112
    %v503 = vunpack.c.l.b16 %v113
    %v504 = vunpack.c.h.b16 %v113
    %v505 = vunpack.c.l.b16 %v114
    %v506 = vunpack.c.h.b16 %v114
    %v507 = vunpack.c.l.b16 %v115
    %v508 = vunpack.c.h.b16 %v115
    %v509 = vunpack.c.l.b16 %v116
    %v510 = vunpack.c.h.b16 %v116
    %v511 = vunpack.c.l.b16 %v117
    %v512 = vunpack.c.h.b16 %v117
    %v513 = vunpack.c.l.b16 %v118
    %v514 = vunpack.c.h.b16 %v118
    %v515 = vunpack.c.l.b16 %v119
    %v516 = vunpack.c.h.b16 %v119
    %v517 = vunpack.c.l.b16 %v120
    %v518 = vunpack.c.h.b16 %v120
    %v519 = vunpack.c.l.b16 %v121
    %v520 = vunpack.c.h.b16 %v121
    %v521 = vunpack.c.l.b16 %v122
    %v522 = vunpack.c.h.b16 %v122
    %v523 = vunpack.c.l.b16 %v123
    %v524 = vunpack.c.h.b16 %v123
    %v525 = vunpack.c.l.b16 %v124
    %v526 = vunpack.c.h.b16 %v124
    %v527 = vunpack.c.l.b16 %v125
    %v528 = vunpack.c.h.b16 %v125
    %v529 = vunpack.c.l.b16 %v126
    %v530 = vunpack.c.h.b16 %v126
    %v531 = vunpack.c.l.b16 %v127
    %v532 = vunpack.c.h.b16 %v127
    %v533 = vunpack.c.l.b16 %v128
    %v534 = vunpack.c.h.b16 %v128
    %v535 = vunpack.c.l.b16 %v129
    %v536 = vunpack.c.h.b16 %v129
    %v537 = vunpack.c.l.b16 %v130
    %v538 = vunpack.c.h.b16 %v130
    %v539 = vunpack.c.l.b16 %v131
    %v540 = vunpack.c.h.b16 %v131
    %v541 = vunpack.c.l.b16 %v132
    %v542 = vunpack.c.h.b16 %v132
    %v543 = vunpack.c.l.b16 %v133
    %v544 = vunpack.c.h.b16 %v133
    %v545 = vunpack.c.l.b16 %v134
    %v546 = vunpack.c.h.b16 %v134
    %v547 = vunpack.c.l.b16 %v135
    %v548 = vunpack.c.h.b16 %v135
    %v549 = vunpack.c.l.b16 %v136
    %v550 = vunpack.c.h.b16 %v136
    %v551 = vunpack.c.l.b16 %v137
    %v552 = vunpack.c.h.b16 %v137
    %v553 = vunpack.c.l.b16 %v138
    %v554 = vunpack.c.h.b16 %v138
    %v555 = vunpack.c.l.b16 %v139
    %v556 = vunpack.c.h.b16 %v139
    %v557 = vunpack.c.l.b16 %v140
    %v558 = vunpack.c.h.b16 %v140
    %v559 = vunpack.c.l.b16 %v141
    %v560 = vunpack.c.h.b16 %v141
    %v561 = vunpack.c.l.b16 %v142
    %v562 = vunpack.c.h.b16 %v142
    %v563 = vunpack.c.l.b16 %v143
    %v564 = vunpack.c.h.b16 %v143
    %v565 = vunpack.c.l.b16 %v144
    %v566 = vunpack.c.h.b16 %v144
    %v567 = vunpack.c.l.b16 %v145
    %v568 = vunpack.c.h.b16 %v145
    %v569 = vunpack.c.l.b16 %v146
    %v570 = vunpack.c.h.b16 %v146
    %v571 = vunpack.c.l.b16 %v147
    %v572 = vunpack.c.h.b16 %v147
    %v573 = vunpack.c.l.b16 %v148
    %v574 = vunpack.c.h.b16 %v148
    %v575 = vunpack.c.l.b16 %v149
    %v576 = vunpack.c.h.b16 %v149
    %v577 = vunpack.c.l.b16 %v150
    %v578 = vunpack.c.h.b16 %v150
    %v579 = vunpack.c.l.b16 %v151
    %v580 = vunpack.c.h.b16 %v151
    %v581 = vunpack.c.l.b16 %v152
    %v582 = vunpack.c.h.b16 %v152
    %v583 = vunpack.c.l.b16 %v153
    %v584 = vunpack.c.h.b16 %v153
    %v585 = vunpack.c.l.b16 %v154
    %v586 = vunpack.c.h.b16 %v154
    %v587 = vunpack.c.l.b16 %v155
    %v588 = vunpack.c.h.b16 %v155
    %v589 = vunpack.c.l.b16 %v156
    %v590 = vunpack.c.h.b16 %v156
    %v591 = vunpack.c.l.b16 %v157
    %v592 = vunpack.c.h.b16 %v157
    %v593 = vunpack.c.l.b16 %v158
    %v594 = vunpack.c.h.b16 %v158
    %v595 = vunpack.c.l.b16 %v159
    %v596 = vunpack.c.h.b16 %v159
    %v597 = vunpack.c.l.b16 %v160
    %v598 = vunpack.c.h.b16 %v160
    %v599 = vunpack.c.l.b16 %v161
    %v600 = vunpack.c.h.b16 %v161
    %v601 = vunpack.c.l.b16 %v162
    %v602 = vunpack.c.h.b16 %v162
    %v603 = vunpack.c.l.b16 %v163
    %v604 = vunpack.c.h.b16 %v163
    %v605 = vunpack.c.l.b16 %v164
    %v606 = vunpack.c.h.b16 %v164
    %v607 = vunpack.c.l.b16 %v165
    %v608 = vunpack.c.h.b16 %v165
    %v609 = vunpack.c.l.b16 %v166
    %v610 = vunpack.c.h.b16 %v166
    %v611 = vunpack.c.l.b16 %v167
    %v612 = vunpack.c.h.b16 %v167
    %v613 = vunpack.c.l.b16 %v168
    %v614 = vunpack.c.h.b16 %v168
    %v615 = vunpack.c.l.b16 %v169
    %v616 = vunpack.c.h.b16 %v169
    %v617 = vunpack.c.l.b16 %v170
    %v618 = vunpack.c.h.b16 %v170
    %v619 = vunpack.c.l.b16 %v171
    %v620 = vunpack.c.h.b16 %v171
    %v621 = vunpack.c.l.b16 %v172
    %v622 = vunpack.c.h.b16 %v172
    %v623 = vunpack.c.l.b16 %v173
    %v624 = vunpack.c.h.b16 %v173
    %v625 = vunpack.c.l.b16 %v174
    %v626 = vunpack.c.h.b16 %v174
    %v627 = vunpack.c.l.b16 %v175
    %v628 = vunpack.c.h.b16 %v175
    %v629 = vunpack.c.l.b16 %v176
    %v630 = vunpack.c.h.b16 %v176
    %v631 = vpack.c.b16 %v377, %v375
    %v632 = vpack.c.b16 %v378, %v376
    %v633 = vpack.c.b16 %v381, %v379
    %v634 = vpack.c.b16 %v382, %v380
    %v635 = vpack.c.b16 %v385, %v383
    %v636 = vpack.c.b16 %v386, %v384
    %v637 = vpack.c.b16 %v389, %v387
    %v638 = vpack.c.b16 %v390, %v388
    %v639 = vpack.c.b16 %v393, %v391
    %v640 = vpack.c.b16 %v394, %v392
    %v641 = vpack.c.b16 %v397, %v395
    %v642 = vpack.c.b16 %v398, %v396
    %v643 = vpack.c.b16 %v401, %v399
    %v644 = vpack.c.b16 %v402, %v400
    %v645 = vpack.c.b16 %v405, %v403
    %v646 = vpack.c.b16 %v406, %v404
    %v647 = vpack.c.b16 %v409, %v407
    %v648 = vpack.c.b16 %v410, %v408
    %v649 = vpack.c.b16 %v413, %v411
    %v650 = vpack.c.b16 %v414, %v412
    %v651 = vpack.c.b16 %v417, %v415
    %v652 = vpack.c.b16 %v418, %v416
    %v653 = vpack.c.b16 %v421, %v419
    %v654 = vpack.c.b16 %v422, %v420
    %v655 = vpack.c.b16 %v425, %v423
    %v656 = vpack.c.b16 %v426, %v424
    %v657 = vpack.c.b16 %v429, %v427
    %v658 = vpack.c.b16 %v430, %v428
    %v659 = vpack.c.b16 %v433, %v431
    %v660 = vpack.c.b16 %v434, %v432
    %v661 = vpack.c.b16 %v437, %v435
    %v662 = vpack.c.b16 %v438, %v436
    %v663 = vpack.c.b16 %v441, %v439
    %v664 = vpack.c.b16 %v442, %v440
    %v665 = vpack.c.b16 %v445, %v443
    %v666 = vpack.c.b16 %v446, %v444
    %v667 = vpack.c.b16 %v449, %v447
    %v668 = vpack.c.b16 %v450, %v448
    %v669 = vpack.c.b16 %v453, %v451
    %v670 = vpack.c.b16 %v454, %v452
    %v671 = vpack.c.b16 %v457, %v455
    %v672 = vpack.c.b16 %v458, %v456
    %v673 = vpack.c.b16 %v461, %v459
    %v674 = vpack.c.b16 %v462, %v460
    %v675 = vpack.c.b16 %v465, %v463
    %v676 = vpack.c.b16 %v466, %v464
    %v677 = vpack.c.b16 %v469, %v467
    %v678 = vpack.c.b16 %v470, %v468
    %v679 = vpack.c.b16 %v473, %v471
    %v680 = vpack.c.b16 %v474, %v472
    %v681 = vpack.c.b16 %v477, %v475
    %v682 = vpack.c.b16 %v478, %v476
    %v683 = vpack.c.b16 %v481, %v479
    %v684 = vpack.c.b16 %v482, %v480
    %v685 = vpack.c.b16 %v485, %v483
    %v686 = vpack.c.b16 %v486, %v484
    %v687 = vpack.c.b16 %v489, %v487
    %v688 = vpack.c.b16 %v490, %v488
    %v689 = vpack.c.b16 %v493, %v491
    %v690 = vpack.c.b16 %v494, %v492
    %v691 = vpack.c.b16 %v497, %v495
    %v692 = vpack.c.b16 %v498, %v496
    %v693 = vpack.c.b16 %v501, %v499
    %v694 = vpack.c.b16 %v502, %v500
    %v695 = vpack.c.b16 %v505, %v503
    %v696 = vpack.c.b16 %v506, %v504
    %v697 = vpack.c.b16 %v509, %v507
    %v698 = vpack.c.b16 %v510, %v508
    %v699 = vpack.c.b16 %v513, %v511
    %v700 = vpack.c.b16 %v514, %v512
    %v701 = vpack.c.b16 %v517, %v515
    %v702 = vpack.c.b16 %v518, %v516
    %v703 = vpack.c.b16 %v521, %v519
    %v704 = vpack.c.b16 %v522, %v520
    %v705 = vpack.c.b16 %v525, %v523
    %v706 = vpack.c.b16 %v526, %v524
    %v707 = vpack.c.b16 %v529, %v527
    %v708 = vpack.c.b16 %v530, %v528
    %v709 = vpack.c.b16 %v533, %v531
    %v710 = vpack.c.b16 %v534, %v532
    %v711 = vpack.c.b16 %v537, %v535
    %v712 = vpack.c.b16 %v538, %v536
    %v713 = vpack.c.b16 %v541, %v539
    %v714 = vpack.c.b16 %v542, %v540
    %v715 = vpack.c.b16 %v545, %v543
    %v716 = vpack.c.b16 %v546, %v544
    %v717 = vpack.c.b16 %v549, %v547
    %v718 = vpack.c.b16 %v550, %v548
    %v719 = vpack.c.b16 %v553, %v551
    %v720 = vpack.c.b16 %v554, %v552
    %v721 = vpack.c.b16 %v557, %v555
    %v722 = vpack.c.b16 %v558, %v556
    %v723 = vpack.c.b16 %v561, %v559
    %v724 = vpack.c.b16 %v562, %v560
    %v725 = vpack.c.b16 %v565, %v563
    %v726 = vpack.c.b16 %v566, %v564
    %v727 = vpack.c.b16 %v569, %v567
    %v728 = vpack.c.b16 %v570, %v568
    %v729 = vpack.c.b16 %v573, %v571
    %v730 = vpack.c.b16 %v574, %v572
    %v731 = vpack.c.b16 %v577, %v575
    %v732 = vpack.c.b16 %v578, %v576
    %v733 = vpack.c.b16 %v581, %v579
    %v734 = vpack.c.b16 %v582, %v580
    %v735 = vpack.c.b16 %v585, %v583
    %v736 = vpack.c.b16 %v586, %v584
    %v737 = vpack.c.b16 %v589, %v587
    %v738 = vpack.c.b16 %v590, %v588
    %v739 = vpack.c.b16 %v593, %v591
    %v740 = vpack.c.b16 %v594, %v592
    %v741 = vpack.c.b16 %v597, %v595
    %v742 = vpack.c.b16 %v598, %v596
    %v743 = vpack.c.b16 %v601, %v599
    %v744 = vpack.c.b16 %v602, %v600
    %v745 = vpack.c.b16 %v605, %v603
    %v746 = vpack.c.b16 %v606, %v604
    %v747 = vpack.c.b16 %v609, %v607
    %v748 = vpack.c.b16 %v610, %v608
    %v749 = vpack.c.b16 %v613, %v611
    %v750 = vpack.c.b16 %v614, %v612
    %v751 = vpack.c.b16 %v617, %v615
    %v752 = vpack.c.b16 %v618, %v616
    %v753 = vpack.c.b16 %v621, %v619
    %v754 = vpack.c.b16 %v622, %v620
    %v755 = vpack.c.b16 %v625, %v623
    %v756 = vpack.c.b16 %v626, %v624
    %v757 = vpack.c.b16 %v629, %v627
    %v758 = vpack.c.b16 %v630, %v628
    %887 = vmatprep.subr.bf16.mxu0 %v646
    %888 = vmatpush1.bf16.msra.mxu0 %v645
    %889 = vmatprep.subr.bf16.mxu0 %v644
    %890 = vmatpush1.bf16.msra.mxu0 %v643
    %891 = vmatprep.subr.bf16.mxu0 %v642
    %892 = vmatpush1.bf16.msra.mxu0 %v641
    %893 = vmatprep.subr.bf16.mxu0 %v640
    %894 = vmatpush1.bf16.msra.mxu0 %v639
    %895 = vmatprep.subr.bf16.mxu0 %v638
    %896 = vmatpush1.bf16.msra.mxu0 %v637
    %897 = vmatprep.subr.bf16.mxu0 %v636
    %898 = vmatpush1.bf16.msra.mxu0 %v635
    %899 = vmatprep.subr.bf16.mxu0 %v634
    %900 = vmatpush1.bf16.msra.mxu0 %v633
    %901 = vmatprep.subr.bf16.mxu0 %v632
    %902 = vmatpush1.bf16.msra.mxu0 %v631
    %903 = vmatprep.subr.bf16.mxu0 %v662
    %904 = vmatpush2.bf16.msra.mxu0 %v661
    %905 = vmatprep.subr.bf16.mxu0 %v660
    %906 = vmatpush2.bf16.msra.mxu0 %v659
    %907 = vmatprep.subr.bf16.mxu0 %v658
    %908 = vmatpush2.bf16.msra.mxu0 %v657
    %909 = vmatprep.subr.bf16.mxu0 %v656
    %910 = vmatpush2.bf16.msra.mxu0 %v655
    %911 = vmatprep.subr.bf16.mxu0 %v654
    %912 = vmatpush2.bf16.msra.mxu0 %v653
    %913 = vmatprep.subr.bf16.mxu0 %v652
    %914 = vmatpush2.bf16.msra.mxu0 %v651
    %915 = vmatprep.subr.bf16.mxu0 %v650
    %916 = vmatpush2.bf16.msra.mxu0 %v649
    %917 = vmatprep.subr.bf16.mxu0 %v648
    %918 = vmatpush2.bf16.msra.mxu0 %v647
    %919 = vmatprep.mubr.bf16.mxu0 %v227
    %920 = vmatmul.mubr.bf16.gmra.mxu0 %v213
    %v921 = vpop.f32.mrf.mxu0
    %v922 = vadd.f32 %v182, %v921
    %v923 = vpop.f32.mrf.mxu0
    %v924 = vadd.f32 %v186, %v923
    %v925 = vpop.f32.mrf.mxu0
    %v926 = vpop.f32.mrf.mxu0
    %927 = vdwg.mxu0
    %928 = vmatprep.subr.bf16.mxu0 %v678
    %929 = vmatpush1.bf16.msra.mxu0 %v677
    %930 = vmatprep.subr.bf16.mxu0 %v676
    %931 = vmatpush1.bf16.msra.mxu0 %v675
    %932 = vmatprep.subr.bf16.mxu0 %v674
    %933 = vmatpush1.bf16.msra.mxu0 %v673
    %934 = vmatprep.subr.bf16.mxu0 %v672
    %935 = vmatpush1.bf16.msra.mxu0 %v671
    %936 = vmatprep.subr.bf16.mxu0 %v670
    %937 = vmatpush1.bf16.msra.mxu0 %v669
    %938 = vmatprep.subr.bf16.mxu0 %v668
    %939 = vmatpush1.bf16.msra.mxu0 %v667
    %940 = vmatprep.subr.bf16.mxu0 %v666
    %941 = vmatpush1.bf16.msra.mxu0 %v665
    %942 = vmatprep.subr.bf16.mxu0 %v664
    %943 = vmatpush1.bf16.msra.mxu0 %v663
    %944 = vmatprep.subr.bf16.mxu0 %v694
    %945 = vmatpush2.bf16.msra.mxu0 %v693
    %946 = vmatprep.subr.bf16.mxu0 %v692
    %947 = vmatpush2.bf16.msra.mxu0 %v691
    %948 = vmatprep.subr.bf16.mxu0 %v690
    %949 = vmatpush2.bf16.msra.mxu0 %v689
    %950 = vmatprep.subr.bf16.mxu0 %v688
    %951 = vmatpush2.bf16.msra.mxu0 %v687
    %952 = vmatprep.subr.bf16.mxu0 %v686
    %953 = vmatpush2.bf16.msra.mxu0 %v685
    %954 = vmatprep.subr.bf16.mxu0 %v684
    %955 = vmatpush2.bf16.msra.mxu0 %v683
    %956 = vmatprep.subr.bf16.mxu0 %v682
    %957 = vmatpush2.bf16.msra.mxu0 %v681
    %958 = vmatprep.subr.bf16.mxu0 %v680
    %959 = vmatpush2.bf16.msra.mxu0 %v679
    %960 = vmatprep.mubr.bf16.mxu0 %v237
    %961 = vmatmul.mubr.bf16.gmra.mxu0 %v235
    %v962 = vpop.f32.mrf.mxu0
    %v963 = vadd.f32 %v922, %v962
    %v964 = vpop.f32.mrf.mxu0
    %v965 = vadd.f32 %v924, %v964
    %v966 = vpop.f32.mrf.mxu0
    %v967 = vpop.f32.mrf.mxu0
    %968 = vdwg.mxu0
    %969 = vmatprep.subr.bf16.mxu0 %v710
    %970 = vmatpush1.bf16.msra.mxu0 %v709
    %971 = vmatprep.subr.bf16.mxu0 %v708
    %972 = vmatpush1.bf16.msra.mxu0 %v707
    %973 = vmatprep.subr.bf16.mxu0 %v706
    %974 = vmatpush1.bf16.msra.mxu0 %v705
    %975 = vmatprep.subr.bf16.mxu0 %v704
    %976 = vmatpush1.bf16.msra.mxu0 %v703
    %977 = vmatprep.subr.bf16.mxu0 %v702
    %978 = vmatpush1.bf16.msra.mxu0 %v701
    %979 = vmatprep.subr.bf16.mxu0 %v700
    %980 = vmatpush1.bf16.msra.mxu0 %v699
    %981 = vmatprep.subr.bf16.mxu0 %v698
    %982 = vmatpush1.bf16.msra.mxu0 %v697
    %983 = vmatprep.subr.bf16.mxu0 %v696
    %984 = vmatpush1.bf16.msra.mxu0 %v695
    %985 = vmatprep.subr.bf16.mxu0 %v726
    %986 = vmatpush2.bf16.msra.mxu0 %v725
    %987 = vmatprep.subr.bf16.mxu0 %v724
    %988 = vmatpush2.bf16.msra.mxu0 %v723
    %989 = vmatprep.subr.bf16.mxu0 %v722
    %990 = vmatpush2.bf16.msra.mxu0 %v721
    %991 = vmatprep.subr.bf16.mxu0 %v720
    %992 = vmatpush2.bf16.msra.mxu0 %v719
    %993 = vmatprep.subr.bf16.mxu0 %v718
    %994 = vmatpush2.bf16.msra.mxu0 %v717
    %995 = vmatprep.subr.bf16.mxu0 %v716
    %996 = vmatpush2.bf16.msra.mxu0 %v715
    %997 = vmatprep.subr.bf16.mxu0 %v714
    %998 = vmatpush2.bf16.msra.mxu0 %v713
    %999 = vmatprep.subr.bf16.mxu0 %v712
    %1000 = vmatpush2.bf16.msra.mxu0 %v711
    %1001 = vmatprep.mubr.bf16.mxu0 %v234
    %1002 = vmatmul.mubr.bf16.gmra.mxu0 %v220
    %v1003 = vpop.f32.mrf.mxu0
    %v1004 = vadd.f32 %v963, %v1003
    %v1005 = vpop.f32.mrf.mxu0
    %v1006 = vadd.f32 %v965, %v1005
    %v1007 = vpop.f32.mrf.mxu0
    %v1008 = vpop.f32.mrf.mxu0
    %1009 = vdwg.mxu0
    %1010 = vmatprep.subr.bf16.mxu0 %v742
    %1011 = vmatpush1.bf16.msra.mxu0 %v741
    %1012 = vmatprep.subr.bf16.mxu0 %v740
    %1013 = vmatpush1.bf16.msra.mxu0 %v739
    %1014 = vmatprep.subr.bf16.mxu0 %v738
    %1015 = vmatpush1.bf16.msra.mxu0 %v737
    %1016 = vmatprep.subr.bf16.mxu0 %v736
    %1017 = vmatpush1.bf16.msra.mxu0 %v735
    %1018 = vmatprep.subr.bf16.mxu0 %v734
    %1019 = vmatpush1.bf16.msra.mxu0 %v733
    %1020 = vmatprep.subr.bf16.mxu0 %v732
    %1021 = vmatpush1.bf16.msra.mxu0 %v731
    %1022 = vmatprep.subr.bf16.mxu0 %v730
    %1023 = vmatpush1.bf16.msra.mxu0 %v729
    %1024 = vmatprep.subr.bf16.mxu0 %v728
    %1025 = vmatpush1.bf16.msra.mxu0 %v727
    %1026 = vmatprep.subr.bf16.mxu0 %v758
    %1027 = vmatpush2.bf16.msra.mxu0 %v757
    %1028 = vmatprep.subr.bf16.mxu0 %v756
    %1029 = vmatpush2.bf16.msra.mxu0 %v755
    %1030 = vmatprep.subr.bf16.mxu0 %v754
    %1031 = vmatpush2.bf16.msra.mxu0 %v753
    %1032 = vmatprep.subr.bf16.mxu0 %v752
    %1033 = vmatpush2.bf16.msra.mxu0 %v751
    %1034 = vmatprep.subr.bf16.mxu0 %v750
    %1035 = vmatpush2.bf16.msra.mxu0 %v749
    %1036 = vmatprep.subr.bf16.mxu0 %v748
    %1037 = vmatpush2.bf16.msra.mxu0 %v747
    %1038 = vmatprep.subr.bf16.mxu0 %v746
    %1039 = vmatpush2.bf16.msra.mxu0 %v745
    %1040 = vmatprep.subr.bf16.mxu0 %v744
    %1041 = vmatpush2.bf16.msra.mxu0 %v743
    %1042 = vmatprep.mubr.bf16.mxu0 %v238
    %1043 = vmatmul.mubr.bf16.gmra.mxu0 %v236
    %v1044 = vpop.f32.mrf.mxu0
    %v1045 = vadd.f32 %v1004, %v1044
    %v1046 = vpop.f32.mrf.mxu0
    %v1047 = vadd.f32 %v1006, %v1046
    %v1048 = vpop.f32.mrf.mxu0
    %v1049 = vpop.f32.mrf.mxu0
    %1050 = vdwg.mxu0
    %v1051 = vmax.f32 %v1045, 0.0
    %v1052 = vmax.f32 %v1047, 0.0
    %v1053 = vld [vmem:[%s1] sm:$0x3]
    %v1054 = vunpack.c.l.bf16 %v1053
    %v1057 = vunpack.c.l.s4 1983009808
    %v1058 = vunpack.c.0.s8 %v1057
    %v1059 = vlaneseq
    %v1060 = vshrl.u32 %v1059, 7
    %v1061 = vsub.s32 %v1058, %v1060
    %v1062 = vrot.slane %v1054, %v1061
    %v1063 = vcombine.high %v1062, %v1062
    %v1066 = vmul.f32 %v1051, %v1062
    %v1067 = vmul.f32 %v1052, %v1063
    %v1068 = vpack.c.bf16 %v1066, %v1066
    %v1069 = vpack.c.bf16 %v1067, %v1067
    %v1070 = vld [vmem:[%s5] sm:$0xf]
    %v1071 = vld [vmem:[%s5 + $0x4] sm:$0xf]
    %v1072 = vld [vmem:[%s5 + $0x8] sm:$0xf]
    %v1073 = vld [vmem:[%s5 + $0xc] sm:$0xf]
    %v1074 = vld [vmem:[%s5 + $0x10] sm:$0xf]
    %v1075 = vld [vmem:[%s5 + $0x14] sm:$0xf]
    %v1076 = vld [vmem:[%s5 + $0x18] sm:$0xf]
    %v1077 = vld [vmem:[%s5 + $0x1c] sm:$0xf]
    %v1078 = vld [vmem:[%s5 + $0x20] sm:$0xf]
    %v1079 = vld [vmem:[%s5 + $0x24] sm:$0xf]
    %v1080 = vld [vmem:[%s5 + $0x28] sm:$0xf]
    %v1081 = vld [vmem:[%s5 + $0x2c] sm:$0xf]
    %v1082 = vld [vmem:[%s5 + $0x30] sm:$0xf]
    %v1083 = vld [vmem:[%s5 + $0x34] sm:$0xf]
    %v1084 = vld [vmem:[%s5 + $0x38] sm:$0xf]
    %v1085 = vld [vmem:[%s5 + $0x3c] sm:$0xf]
    %v1086 = vld [vmem:[%s5 + $0x40] sm:$0xf]
    %v1087 = vld [vmem:[%s5 + $0x44] sm:$0xf]
    %v1088 = vld [vmem:[%s5 + $0x48] sm:$0xf]
    %v1089 = vld [vmem:[%s5 + $0x4c] sm:$0xf]
    %v1090 = vld [vmem:[%s5 + $0x50] sm:$0xf]
    %v1091 = vld [vmem:[%s5 + $0x54] sm:$0xf]
    %v1092 = vld [vmem:[%s5 + $0x58] sm:$0xf]
    %v1093 = vld [vmem:[%s5 + $0x5c] sm:$0xf]
    %v1094 = vld [vmem:[%s5 + $0x60] sm:$0xf]
    %v1095 = vld [vmem:[%s5 + $0x64] sm:$0xf]
    %v1096 = vld [vmem:[%s5 + $0x68] sm:$0xf]
    %v1097 = vld [vmem:[%s5 + $0x6c] sm:$0xf]
    %v1098 = vld [vmem:[%s5 + $0x70] sm:$0xf]
    %v1099 = vld [vmem:[%s5 + $0x74] sm:$0xf]
    %v1100 = vld [vmem:[%s5 + $0x78] sm:$0xf]
    %v1101 = vld [vmem:[%s5 + $0x7c] sm:$0xf]
    %v1102 = vld [vmem:[%s6] sm:$0x1]
    %v1104 = vlaneseq
    %v1105 = vshrl.u32 %v1104, 7
    %v1106 = vsub.s32 0, %v1105
    %v1107 = vrot.slane %v1102, %v1106
    %v1141 = vunpack.c.l.b16 %v1070
    %v1142 = vunpack.c.l.b16 %v1071
    %v1143 = vunpack.c.l.b16 %v1072
    %v1144 = vunpack.c.l.b16 %v1073
    %v1145 = vunpack.c.l.b16 %v1074
    %v1146 = vunpack.c.l.b16 %v1075
    %v1147 = vunpack.c.l.b16 %v1076
    %v1148 = vunpack.c.l.b16 %v1077
    %v1149 = vunpack.c.l.b16 %v1078
    %v1150 = vunpack.c.l.b16 %v1079
    %v1151 = vunpack.c.l.b16 %v1080
    %v1152 = vunpack.c.l.b16 %v1081
    %v1153 = vunpack.c.l.b16 %v1082
    %v1154 = vunpack.c.l.b16 %v1083
    %v1155 = vunpack.c.l.b16 %v1084
    %v1156 = vunpack.c.l.b16 %v1085
    %v1157 = vunpack.c.l.b16 %v1086
    %v1158 = vunpack.c.l.b16 %v1087
    %v1159 = vunpack.c.l.b16 %v1088
    %v1160 = vunpack.c.l.b16 %v1089
    %v1161 = vunpack.c.l.b16 %v1090
    %v1162 = vunpack.c.l.b16 %v1091
    %v1163 = vunpack.c.l.b16 %v1092
    %v1164 = vunpack.c.l.b16 %v1093
    %v1165 = vunpack.c.l.b16 %v1094
    %v1166 = vunpack.c.l.b16 %v1095
    %v1167 = vunpack.c.l.b16 %v1096
    %v1168 = vunpack.c.l.b16 %v1097
    %v1169 = vunpack.c.l.b16 %v1098
    %v1170 = vunpack.c.l.b16 %v1099
    %v1171 = vunpack.c.l.b16 %v1100
    %v1172 = vunpack.c.l.b16 %v1101
    %v1173 = vpack.c.b16 %v1142, %v1141
    %v1174 = vpack.c.b16 %v1144, %v1143
    %v1175 = vpack.c.b16 %v1146, %v1145
    %v1176 = vpack.c.b16 %v1148, %v1147
    %v1177 = vpack.c.b16 %v1150, %v1149
    %v1178 = vpack.c.b16 %v1152, %v1151
    %v1179 = vpack.c.b16 %v1154, %v1153
    %v1180 = vpack.c.b16 %v1156, %v1155
    %v1181 = vpack.c.b16 %v1158, %v1157
    %v1182 = vpack.c.b16 %v1160, %v1159
    %v1183 = vpack.c.b16 %v1162, %v1161
    %v1184 = vpack.c.b16 %v1164, %v1163
    %v1185 = vpack.c.b16 %v1166, %v1165
    %v1186 = vpack.c.b16 %v1168, %v1167
    %v1187 = vpack.c.b16 %v1170, %v1169
    %v1188 = vpack.c.b16 %v1172, %v1171
    %1205 = vmatprep.subr.bf16.mxu0 0
    %1206 = vmatpush1.bf16.msra.mxu0 %v1180
    %1207 = vmatprep.subr.bf16.mxu0 0
    %1208 = vmatpush1.bf16.msra.mxu0 %v1179
    %1209 = vmatprep.subr.bf16.mxu0 0
    %1210 = vmatpush1.bf16.msra.mxu0 %v1178
    %1211 = vmatprep.subr.bf16.mxu0 0
    %1212 = vmatpush1.bf16.msra.mxu0 %v1177
    %1213 = vmatprep.subr.bf16.mxu0 0
    %1214 = vmatpush1.bf16.msra.mxu0 %v1176
    %1215 = vmatprep.subr.bf16.mxu0 0
    %1216 = vmatpush1.bf16.msra.mxu0 %v1175
    %1217 = vmatprep.subr.bf16.mxu0 0
    %1218 = vmatpush1.bf16.msra.mxu0 %v1174
    %1219 = vmatprep.subr.bf16.mxu0 0
    %1220 = vmatpush1.bf16.msra.mxu0 %v1173
    %1221 = vmatprep.subr.bf16.mxu0 0
    %1222 = vmatpush2.bf16.msra.mxu0 %v1188
    %1223 = vmatprep.subr.bf16.mxu0 0
    %1224 = vmatpush2.bf16.msra.mxu0 %v1187
    %1225 = vmatprep.subr.bf16.mxu0 0
    %1226 = vmatpush2.bf16.msra.mxu0 %v1186
    %1227 = vmatprep.subr.bf16.mxu0 0
    %1228 = vmatpush2.bf16.msra.mxu0 %v1185
    %1229 = vmatprep.subr.bf16.mxu0 0
    %1230 = vmatpush2.bf16.msra.mxu0 %v1184
    %1231 = vmatprep.subr.bf16.mxu0 0
    %1232 = vmatpush2.bf16.msra.mxu0 %v1183
    %1233 = vmatprep.subr.bf16.mxu0 0
    %1234 = vmatpush2.bf16.msra.mxu0 %v1182
    %1235 = vmatprep.subr.bf16.mxu0 0
    %1236 = vmatpush2.bf16.msra.mxu0 %v1181
    %1237 = vmatprep.mubr.bf16.mxu0 %v1069
    %1238 = vmatmul.mubr.bf16.gmra.mxu0 %v1068
    %v1239 = vpop.f32.mrf.mxu0
    %v1240 = vadd.f32 %v1107, %v1239
    %v1241 = vpop.f32.mrf.mxu0
    %v1242 = vpop.f32.mrf.mxu0
    %v1243 = vpop.f32.mrf.mxu0
    %1244 = vdwg.mxu0
    %v1245 = vmax.f32 %v1240, 0.0
    %v1246 = vld [vmem:[%s2] sm:$0x1]
    %v1247 = vunpack.c.l.bf16 %v1246
    %v1248 = vmul.f32 %v1245, %v1247
    %v1249 = vpack.c.bf16 %v1248, %v1248
    %v1250 = vld [vmem:[%s7] sm:$0xf]
    %v1251 = vld [vmem:[%s7 + $0x4] sm:$0xf]
    %v1252 = vld [vmem:[%s7 + $0x8] sm:$0xf]
    %v1253 = vld [vmem:[%s7 + $0xc] sm:$0xf]
    %v1254 = vld [vmem:[%s7 + $0x10] sm:$0xf]
    %v1255 = vld [vmem:[%s7 + $0x14] sm:$0xf]
    %v1256 = vld [vmem:[%s7 + $0x18] sm:$0xf]
    %v1257 = vld [vmem:[%s7 + $0x1c] sm:$0xf]
    %v1258 = vld [vmem:[%s8] sm:$0x1]
    %v1260 = vlaneseq
    %v1261 = vshrl.u32 %v1260, 7
    %v1262 = vsub.s32 0, %v1261
    %v1263 = vrot.slane %v1258, %v1262
    %v1273 = vunpack.c.l.b16 %v1250
    %v1274 = vunpack.c.l.b16 %v1251
    %v1275 = vunpack.c.l.b16 %v1252
    %v1276 = vunpack.c.l.b16 %v1253
    %v1277 = vunpack.c.l.b16 %v1254
    %v1278 = vunpack.c.l.b16 %v1255
    %v1279 = vunpack.c.l.b16 %v1256
    %v1280 = vunpack.c.l.b16 %v1257
    %v1281 = vpack.c.b16 %v1274, %v1273
    %v1282 = vpack.c.b16 %v1276, %v1275
    %v1283 = vpack.c.b16 %v1278, %v1277
    %v1284 = vpack.c.b16 %v1280, %v1279
    %vm1289 = vcmask 523264
    %v1291 = vsel %vm1289, %v1249, 0
    %1293 = vmatprep.subr.bf16.mxu0 0
    %1294 = vmatpush1.bf16.msra.mxu0 0
    %1295 = vmatprep.subr.bf16.mxu0 0
    %1296 = vmatpush1.bf16.msra.mxu0 0
    %1297 = vmatprep.subr.bf16.mxu0 0
    %1298 = vmatpush1.bf16.msra.mxu0 0
    %1299 = vmatprep.subr.bf16.mxu0 0
    %1300 = vmatpush1.bf16.msra.mxu0 0
    %1301 = vmatprep.subr.bf16.mxu0 0
    %1302 = vmatpush1.bf16.msra.mxu0 %v1284
    %1303 = vmatprep.subr.bf16.mxu0 0
    %1304 = vmatpush1.bf16.msra.mxu0 %v1283
    %1305 = vmatprep.subr.bf16.mxu0 0
    %1306 = vmatpush1.bf16.msra.mxu0 %v1282
    %1307 = vmatprep.subr.bf16.mxu0 0
    %1308 = vmatpush1.bf16.msra.mxu0 %v1281
    %1309 = vmatprep.subr.bf16.mxu0 0
    %1310 = vmatpush2.bf16.msra.mxu0 0
    %1311 = vmatprep.subr.bf16.mxu0 0
    %1312 = vmatpush2.bf16.msra.mxu0 0
    %1313 = vmatprep.subr.bf16.mxu0 0
    %1314 = vmatpush2.bf16.msra.mxu0 0
    %1315 = vmatprep.subr.bf16.mxu0 0
    %1316 = vmatpush2.bf16.msra.mxu0 0
    %1317 = vmatprep.subr.bf16.mxu0 0
    %1318 = vmatpush2.bf16.msra.mxu0 0
    %1319 = vmatprep.subr.bf16.mxu0 0
    %1320 = vmatpush2.bf16.msra.mxu0 0
    %1321 = vmatprep.subr.bf16.mxu0 0
    %1322 = vmatpush2.bf16.msra.mxu0 0
    %1323 = vmatprep.subr.bf16.mxu0 0
    %1324 = vmatpush2.bf16.msra.mxu0 0
    %1325 = vmatprep.mubr.bf16.mxu0 0
    %1326 = vmatmul.mubr.bf16.gmra.mxu0 %v1291
    %v1327 = vpop.f32.mrf.mxu0
    %v1328 = vadd.f32 %v1263, %v1327
    %v1329 = vpop.f32.mrf.mxu0
    %v1330 = vpop.f32.mrf.mxu0
    %v1331 = vpop.f32.mrf.mxu0
    %1332 = vdwg.mxu0
    %1333 = vst [vmem:[#allocation5] sm:$0x3] %v1328
    // Predicated region
    $region42: #{tpu_custom_call.1} parent=1 // pred_check
      _
    $region43: #{tpu_custom_call.1} parent=1 // pred_check_branch
      %1335 = sbr.rel (0) target = $region45
    $region44: #{tpu_custom_call.1} parent=1 // pred_region
      %s1337 = ssub.s32 32, 32
      %1338 = vsyncadd [#allocation4], %s1337
      %s1340 = sshll.u32 [#allocation5], 4
      %s1341 = int_to_ptr.vmem [resolvable:$true] %s1340
      %1343 = dma.vmem_to_hbm [thread:$0]  %s1341, 32, %s9, [#allocation4]
    $region45: #{tpu_custom_call.1} parent=1 // pred_fallthru
      _
    // Predicated region
    $region46: #{tpu_custom_call.1} parent=1 // pred_check
      _
    $region47: #{tpu_custom_call.1} parent=1 // pred_check_branch
      %1345 = sbr.rel (0) target = $region49
    $region48: #{tpu_custom_call.1} parent=1 // pred_region
      %1346 = dma.done [#allocation4], 32
    $region49: #{tpu_custom_call.1} parent=1 // pred_fallthru
      _
    %1347 = vsyncpa [#allocation3], 1
    %1348 = vsyncpa [#allocation4], 1

</llo_original>
